<compile_context>
chip_gen: v7x
topology: tpu7x:2x2x1
jax: 0.10.0
libtpu: 0.0.40
codegen_flags: <defaults>
</compile_context>

<pallas_src>
import functools

import jax
import jax.numpy as jnp
from jax.experimental import pallas as pl
from jax.experimental.pallas import tpu as pltpu


def _sigmoid(v):
    # Single EUP push (tanh) instead of exp + full-precision divide.
    return 0.5 * jnp.tanh(0.5 * v) + 0.5


def _ungsl_pair_kernel(rows_ref, cols_ref,                    # scalar prefetch (SMEM)
                       s_ij_ref, s_ji_ref,                    # (tile, tile) s blocks
                       econf_j_ref, econf_i_ref,              # (1, tile) exp(-conf)
                       l_col_i_ref, l_col_j_ref,              # (tile, 1) l
                       l_row_j_ref, l_row_i_ref,              # (1, tile) l
                       out_ref,                               # (Np, Np) HBM (pl.ANY)
                       buf_ij, buf_ji, sem,                   # scratch
                       *, zeta, beta, tile):
    p = pl.program_id(0)
    i_blk = rows_ref[p]
    j_blk = cols_ref[p]
    # Offsets are always 128-multiples: either tile % 128 == 0, or there is a single
    # full-extent block and the block index is 0.
    roff = pl.multiple_of(i_blk * tile, 128)
    coff = pl.multiple_of(j_blk * tile, 128)

    def adj(s_blk, econf_row, l_col, l_row):
        # adj = sigmoid(s) * (where(x>0, zeta*sigmoid(x), beta) - l_row), x = econf_row - l_col
        x = econf_row - l_col
        return _sigmoid(s_blk) * (jnp.where(x > 0, zeta * _sigmoid(x), beta) - l_row)

    a_ij = adj(s_ij_ref[...], econf_j_ref[...], l_col_i_ref[...], l_row_j_ref[...])
    a_ji = adj(s_ji_ref[...], econf_i_ref[...], l_col_j_ref[...], l_row_i_ref[...])

    # out[I, J] block = adj(I,J) + adj(J,I).T  (on the diagonal a_ij == a_ji).
    buf_ij[...] = a_ij + a_ji.T
    copy_ij = pltpu.make_async_copy(
        buf_ij, out_ref.at[pl.ds(roff, tile), pl.ds(coff, tile)], sem.at[0])
    copy_ij.start()

    @pl.when(i_blk != j_blk)
    def _():
        # Mirror tile: out[J, I] = out[I, J].T = adj(J,I) + adj(I,J).T
        buf_ji[...] = a_ji + a_ij.T
        copy_ji = pltpu.make_async_copy(
            buf_ji, out_ref.at[pl.ds(coff, tile), pl.ds(roff, tile)], sem.at[1])
        copy_ji.start()
        copy_ji.wait()

    copy_ij.wait()


def _choose_tile(n, max_tile):
    """Square tile: largest 128-multiple divisor of n that is <= max_tile, else full extent."""
    if n <= max_tile:
        return n
    if n % 128 == 0:
        t = max(128, max_tile - (max_tile % 128))
        while n % t != 0:
            t -= 128
        return t
    return n  # unreachable after wrapper-side padding; full-extent fallback


def ungsl_forward(s, confidence, l, zeta, beta, *, max_tile=512):
    N = s.shape[0]
    assert s.shape == (N, N) and confidence.shape == (N,) and l.shape == (N,)
    dtype = s.dtype

    # Pad awkward large sizes up to a 128 multiple so tiles stay (8,128)-legal and
    # VMEM-sized; contributions from padded rows/cols never touch out[:N, :N].
    n_pad = N
    if N > max_tile and N % 128 != 0:
        n_pad = ((N + 127) // 128) * 128
    if n_pad != N:
        pad = n_pad - N
        s = jnp.pad(s, ((0, pad), (0, pad)))
        confidence = jnp.pad(confidence, (0, pad))
        l = jnp.pad(l, (0, pad))

    tile = _choose_tile(n_pad, max_tile)
    nt = n_pad // tile

    # Upper-triangle (incl. diagonal) tile-pair schedule, row-major.
    pair_rows, pair_cols = [], []
    for i in range(nt):
        for j in range(i, nt):
            pair_rows.append(i)
            pair_cols.append(j)
    rows = jnp.asarray(pair_rows, dtype=jnp.int32)
    cols = jnp.asarray(pair_cols, dtype=jnp.int32)
    num_pairs = len(pair_rows)

    econf_row = jnp.exp(-confidence).reshape(1, n_pad)  # hoisted O(N) transcendental
    l_row = l.reshape(1, n_pad)
    l_col = l.reshape(n_pad, 1)

    kernel = functools.partial(
        _ungsl_pair_kernel, zeta=float(zeta), beta=float(beta), tile=tile)

    itemsize = jnp.dtype(dtype).itemsize
    cost = pl.CostEstimate(
        flops=12 * n_pad * n_pad,
        transcendentals=2 * n_pad * n_pad,          # 1 sigmoid(s) + 1 sigmoid(x) per element
        bytes_accessed=2 * n_pad * n_pad * itemsize + 6 * n_pad * itemsize,
    )

    grid_spec = pltpu.PrefetchScalarGridSpec(
        num_scalar_prefetch=2,
        grid=(num_pairs,),
        in_specs=[
            pl.BlockSpec((tile, tile), lambda p, r, c: (r[p], c[p])),   # s[I, J]
            pl.BlockSpec((tile, tile), lambda p, r, c: (c[p], r[p])),   # s[J, I]
            pl.BlockSpec((1, tile),    lambda p, r, c: (0, c[p])),      # exp(-conf)[J] row
            pl.BlockSpec((1, tile),    lambda p, r, c: (0, r[p])),      # exp(-conf)[I] row
            pl.BlockSpec((tile, 1),    lambda p, r, c: (r[p], 0)),      # l[I] column
            pl.BlockSpec((tile, 1),    lambda p, r, c: (c[p], 0)),      # l[J] column
            pl.BlockSpec((1, tile),    lambda p, r, c: (0, c[p])),      # l[J] row
            pl.BlockSpec((1, tile),    lambda p, r, c: (0, r[p])),      # l[I] row
        ],
        out_specs=pl.BlockSpec(memory_space=pl.ANY),                    # manual DMA stores
        scratch_shapes=[
            pltpu.VMEM((tile, tile), dtype),
            pltpu.VMEM((tile, tile), dtype),
            pltpu.SemaphoreType.DMA((2,)),
        ],
    )

    out = pl.pallas_call(
        kernel,
        out_shape=jax.ShapeDtypeStruct((n_pad, n_pad), dtype),
        grid_spec=grid_spec,
        compiler_params=pltpu.CompilerParams(
            dimension_semantics=("parallel",),
            vmem_limit_bytes=32 * 1024 * 1024,
        ),
        cost_estimate=cost,
    )(rows, cols, s, s, econf_row, econf_row, l_col, l_col, l_row, l_row)

    if n_pad != N:
        out = out[:N, :N]
    return out


def ungsl_reference(s, confidence, l, zeta, beta):
    x = jnp.exp(-confidence)[None, :] - l[:, None]
    mask = (x > 0).astype(x.dtype)
    act = mask * zeta * jax.nn.sigmoid(x) + (1.0 - mask) * beta - l[None, :]
    adj = jax.nn.sigmoid(s) * act
    return adj + adj.T


if __name__ == "__main__":
    zeta = 1.1
    beta = -0.1
    key = jax.random.PRNGKey(0)

    # Case 1: tiny graph — single full-extent block, diagonal-pair path only.
    # l matches the torch init: 0.5 * ones(num_nodes).
    n_small = 16
    k_s, k_c, key = jax.random.split(key, 3)
    s_small = jax.random.normal(k_s, (n_small, n_small), dtype=jnp.float32)
    conf_small = jax.random.uniform(k_c, (n_small,), dtype=jnp.float32)
    l_small = jnp.full((n_small,), 0.5, dtype=jnp.float32)

    out_small = jax.block_until_ready(
        ungsl_forward(s_small, conf_small, l_small, zeta, beta))
    ref_small = ungsl_reference(s_small, conf_small, l_small, zeta, beta)
    assert jnp.allclose(out_small, ref_small, atol=1e-5, rtol=1e-5), "mismatch (N=16)"

    # Case 2: larger graph — exercises the tiled pair schedule (2x2 blocks of 128,
    # pairs (0,0), (0,1), (1,1)) including the off-diagonal mirror store.
    n_big = 256
    k_s, k_c = jax.random.split(key)
    s_big = jax.random.normal(k_s, (n_big, n_big), dtype=jnp.float32)
    conf_big = jax.random.uniform(k_c, (n_big,), dtype=jnp.float32)
    l_big = jnp.full((n_big,), 0.5, dtype=jnp.float32)

    out_big = jax.block_until_ready(
        ungsl_forward(s_big, conf_big, l_big, zeta, beta, max_tile=128))
    ref_big = ungsl_reference(s_big, conf_big, l_big, zeta, beta)
    assert jnp.allclose(out_big, ref_big, atol=1e-5, rtol=1e-5), "mismatch (N=256)"

    print("KERNEL_OK")
</pallas_src>

<mosaic_0001>
module attributes {stable_mosaic.version = 11 : i64} {
  func.func @_ungsl_pair_kernel(%arg0: i32, %arg1: memref<1xi32, #tpu.memory_space<smem>>, %arg2: memref<1xi32, #tpu.memory_space<smem>>, %arg3: memref<16x16xf32, #tpu.memory_space<vmem>>, %arg4: memref<16x16xf32, #tpu.memory_space<vmem>>, %arg5: memref<1x16xf32, #tpu.memory_space<vmem>>, %arg6: memref<1x16xf32, #tpu.memory_space<vmem>>, %arg7: memref<16x1xf32, #tpu.memory_space<vmem>>, %arg8: memref<16x1xf32, #tpu.memory_space<vmem>>, %arg9: memref<1x16xf32, #tpu.memory_space<vmem>>, %arg10: memref<1x16xf32, #tpu.memory_space<vmem>>, %arg11: memref<16x16xf32, #tpu.memory_space<any>>, %arg12: memref<16x16xf32, #tpu.memory_space<vmem>>, %arg13: memref<16x16xf32, #tpu.memory_space<vmem>>, %arg14: memref<2x!tpu.dma_semaphore, #tpu.memory_space<semaphore_mem>>) attributes {dimension_semantics = [#tpu.dimension_semantics<parallel>], iteration_bounds = array<i64: 1>, scalar_prefetch = 2 : i64, scratch_operands = 3 : i64, tpu.core_type = #tpu.core_type<tc>, window_params = [{transform_indices = @transform_0, window_bounds = array<i64: 16, 16>}, {transform_indices = @transform_1, window_bounds = array<i64: 16, 16>}, {transform_indices = @transform_2, window_bounds = array<i64: 1, 16>}, {transform_indices = @transform_3, window_bounds = array<i64: 1, 16>}, {transform_indices = @transform_4, window_bounds = array<i64: 16, 1>}, {transform_indices = @transform_5, window_bounds = array<i64: 16, 1>}, {transform_indices = @transform_6, window_bounds = array<i64: 1, 16>}, {transform_indices = @transform_7, window_bounds = array<i64: 1, 16>}, {}]} {
    %0 = arith.index_cast %arg0 : i32 to index
    %1 = memref.load %arg1[%0] : memref<1xi32, #tpu.memory_space<smem>>
    %2 = arith.index_cast %arg0 : i32 to index
    %3 = memref.load %arg2[%2] : memref<1xi32, #tpu.memory_space<smem>>
    %c16_i32 = arith.constant 16 : i32
    %4 = arith.muli %1, %c16_i32 : i32
    %5 = tpu.assume_multiple %4, 128 : i32
    %c16_i32_0 = arith.constant 16 : i32
    %6 = arith.muli %3, %c16_i32_0 : i32
    %7 = tpu.assume_multiple %6, 128 : i32
    %c0 = arith.constant 0 : index
    %c0_1 = arith.constant 0 : index
    %8 = vector.load %arg3[%c0, %c0_1] : memref<16x16xf32, #tpu.memory_space<vmem>>, vector<16x16xf32>
    %c0_2 = arith.constant 0 : index
    %c0_3 = arith.constant 0 : index
    %9 = vector.load %arg5[%c0_2, %c0_3] : memref<1x16xf32, #tpu.memory_space<vmem>>, vector<1x16xf32>
    %c0_4 = arith.constant 0 : index
    %c0_5 = arith.constant 0 : index
    %10 = vector.load %arg7[%c0_4, %c0_5] : memref<16x1xf32, #tpu.memory_space<vmem>>, vector<16x1xf32>
    %c0_6 = arith.constant 0 : index
    %c0_7 = arith.constant 0 : index
    %11 = vector.load %arg9[%c0_6, %c0_7] : memref<1x16xf32, #tpu.memory_space<vmem>>, vector<1x16xf32>
    %12 = vector.broadcast %9 : vector<1x16xf32> to vector<16x16xf32>
    %13 = vector.broadcast %10 : vector<16x1xf32> to vector<16x16xf32>
    %14 = arith.subf %12, %13 : vector<16x16xf32>
    %cst = arith.constant 5.000000e-01 : f32
    %15 = vector.broadcast %cst : f32 to vector<16x16xf32>
    %16 = arith.mulf %15, %8 : vector<16x16xf32>
    %17 = math.tanh %16 : vector<16x16xf32>
    %cst_8 = arith.constant 5.000000e-01 : f32
    %18 = vector.broadcast %cst_8 : f32 to vector<16x16xf32>
    %19 = arith.mulf %18, %17 : vector<16x16xf32>
    %cst_9 = arith.constant 5.000000e-01 : f32
    %20 = vector.broadcast %cst_9 : f32 to vector<16x16xf32>
    %21 = arith.addf %19, %20 : vector<16x16xf32>
    %cst_10 = arith.constant 0.000000e+00 : f32
    %22 = vector.broadcast %cst_10 : f32 to vector<16x16xf32>
    %23 = arith.cmpf ogt, %14, %22 : vector<16x16xf32>
    %cst_11 = arith.constant 5.000000e-01 : f32
    %24 = vector.broadcast %cst_11 : f32 to vector<16x16xf32>
    %25 = arith.mulf %24, %14 : vector<16x16xf32>
    %26 = math.tanh %25 : vector<16x16xf32>
    %cst_12 = arith.constant 5.000000e-01 : f32
    %27 = vector.broadcast %cst_12 : f32 to vector<16x16xf32>
    %28 = arith.mulf %27, %26 : vector<16x16xf32>
    %cst_13 = arith.constant 5.000000e-01 : f32
    %29 = vector.broadcast %cst_13 : f32 to vector<16x16xf32>
    %30 = arith.addf %28, %29 : vector<16x16xf32>
    %cst_14 = arith.constant 1.100000e+00 : f32
    %31 = vector.broadcast %cst_14 : f32 to vector<16x16xf32>
    %32 = arith.mulf %31, %30 : vector<16x16xf32>
    %cst_15 = arith.constant -1.000000e-01 : f32
    %33 = vector.broadcast %cst_15 : f32 to vector<16x16xf32>
    %34 = arith.select %23, %32, %33 : vector<16x16xi1>, vector<16x16xf32>
    %35 = vector.broadcast %11 : vector<1x16xf32> to vector<16x16xf32>
    %36 = arith.subf %34, %35 : vector<16x16xf32>
    %37 = arith.mulf %21, %36 : vector<16x16xf32>
    %c0_16 = arith.constant 0 : index
    %c0_17 = arith.constant 0 : index
    %38 = vector.load %arg4[%c0_16, %c0_17] : memref<16x16xf32, #tpu.memory_space<vmem>>, vector<16x16xf32>
    %c0_18 = arith.constant 0 : index
    %c0_19 = arith.constant 0 : index
    %39 = vector.load %arg6[%c0_18, %c0_19] : memref<1x16xf32, #tpu.memory_space<vmem>>, vector<1x16xf32>
    %c0_20 = arith.constant 0 : index
    %c0_21 = arith.constant 0 : index
    %40 = vector.load %arg8[%c0_20, %c0_21] : memref<16x1xf32, #tpu.memory_space<vmem>>, vector<16x1xf32>
    %c0_22 = arith.constant 0 : index
    %c0_23 = arith.constant 0 : index
    %41 = vector.load %arg10[%c0_22, %c0_23] : memref<1x16xf32, #tpu.memory_space<vmem>>, vector<1x16xf32>
    %42 = vector.broadcast %39 : vector<1x16xf32> to vector<16x16xf32>
    %43 = vector.broadcast %40 : vector<16x1xf32> to vector<16x16xf32>
    %44 = arith.subf %42, %43 : vector<16x16xf32>
    %cst_24 = arith.constant 5.000000e-01 : f32
    %45 = vector.broadcast %cst_24 : f32 to vector<16x16xf32>
    %46 = arith.mulf %45, %38 : vector<16x16xf32>
    %47 = math.tanh %46 : vector<16x16xf32>
    %cst_25 = arith.constant 5.000000e-01 : f32
    %48 = vector.broadcast %cst_25 : f32 to vector<16x16xf32>
    %49 = arith.mulf %48, %47 : vector<16x16xf32>
    %cst_26 = arith.constant 5.000000e-01 : f32
    %50 = vector.broadcast %cst_26 : f32 to vector<16x16xf32>
    %51 = arith.addf %49, %50 : vector<16x16xf32>
    %cst_27 = arith.constant 0.000000e+00 : f32
    %52 = vector.broadcast %cst_27 : f32 to vector<16x16xf32>
    %53 = arith.cmpf ogt, %44, %52 : vector<16x16xf32>
    %cst_28 = arith.constant 5.000000e-01 : f32
    %54 = vector.broadcast %cst_28 : f32 to vector<16x16xf32>
    %55 = arith.mulf %54, %44 : vector<16x16xf32>
    %56 = math.tanh %55 : vector<16x16xf32>
    %cst_29 = arith.constant 5.000000e-01 : f32
    %57 = vector.broadcast %cst_29 : f32 to vector<16x16xf32>
    %58 = arith.mulf %57, %56 : vector<16x16xf32>
    %cst_30 = arith.constant 5.000000e-01 : f32
    %59 = vector.broadcast %cst_30 : f32 to vector<16x16xf32>
    %60 = arith.addf %58, %59 : vector<16x16xf32>
    %cst_31 = arith.constant 1.100000e+00 : f32
    %61 = vector.broadcast %cst_31 : f32 to vector<16x16xf32>
    %62 = arith.mulf %61, %60 : vector<16x16xf32>
    %cst_32 = arith.constant -1.000000e-01 : f32
    %63 = vector.broadcast %cst_32 : f32 to vector<16x16xf32>
    %64 = arith.select %53, %62, %63 : vector<16x16xi1>, vector<16x16xf32>
    %65 = vector.broadcast %41 : vector<1x16xf32> to vector<16x16xf32>
    %66 = arith.subf %64, %65 : vector<16x16xf32>
    %67 = arith.mulf %51, %66 : vector<16x16xf32>
    %68 = tpu.transpose %67, [1, 0] : vector<16x16xf32> -> vector<16x16xf32>
    %69 = arith.addf %37, %68 : vector<16x16xf32>
    %c0_33 = arith.constant 0 : index
    %c0_34 = arith.constant 0 : index
    %70 = vector.load %arg12[%c0_33, %c0_34] : memref<16x16xf32, #tpu.memory_space<vmem>>, vector<16x16xf32>
    tpu.vector_store %arg12[%c0_33, %c0_34], %69 {strides = array<i32>} : memref<16x16xf32, #tpu.memory_space<vmem>>, vector<16x16xf32>,
    %c0_i32 = arith.constant 0 : i32
    %71 = tpu.memref_slice %arg11[%5, %7] : memref<16x16xf32, #tpu.memory_space<any>> -> memref<16x16xf32, #tpu.memory_space<any>>
    %72 = tpu.memref_slice %arg14[%c0_i32] : memref<2x!tpu.dma_semaphore, #tpu.memory_space<semaphore_mem>> -> memref<1x!tpu.dma_semaphore, #tpu.memory_space<semaphore_mem>>
    %73 = tpu.memref_squeeze %72 : memref<1x!tpu.dma_semaphore, #tpu.memory_space<semaphore_mem>> -> memref<!tpu.dma_semaphore, #tpu.memory_space<semaphore_mem>>
    tpu.enqueue_dma source(%arg12 : memref<16x16xf32, #tpu.memory_space<vmem>>) target(%71 : memref<16x16xf32, #tpu.memory_space<any>>) target_semaphore(%73 : memref<!tpu.dma_semaphore, #tpu.memory_space<semaphore_mem>>)
    %74 = arith.cmpi ne, %1, %3 : i32
    %75 = arith.extui %74 : i1 to i32
    %c0_i32_35 = arith.constant 0 : i32
    %76 = arith.cmpi ne, %75, %c0_i32_35 : i32
    scf.if %76 {
      %80 = tpu.transpose %37, [1, 0] : vector<16x16xf32> -> vector<16x16xf32>
      %81 = arith.addf %67, %80 : vector<16x16xf32>
      %c0_37 = arith.constant 0 : index
      %c0_38 = arith.constant 0 : index
      %82 = vector.load %arg13[%c0_37, %c0_38] : memref<16x16xf32, #tpu.memory_space<vmem>>, vector<16x16xf32>
      tpu.vector_store %arg13[%c0_37, %c0_38], %81 {strides = array<i32>} : memref<16x16xf32, #tpu.memory_space<vmem>>, vector<16x16xf32>,
      %c1_i32 = arith.constant 1 : i32
      %83 = tpu.memref_slice %arg11[%7, %5] : memref<16x16xf32, #tpu.memory_space<any>> -> memref<16x16xf32, #tpu.memory_space<any>>
      %84 = tpu.memref_slice %arg14[%c1_i32] : memref<2x!tpu.dma_semaphore, #tpu.memory_space<semaphore_mem>> -> memref<1x!tpu.dma_semaphore, #tpu.memory_space<semaphore_mem>>
      %85 = tpu.memref_squeeze %84 : memref<1x!tpu.dma_semaphore, #tpu.memory_space<semaphore_mem>> -> memref<!tpu.dma_semaphore, #tpu.memory_space<semaphore_mem>>
      tpu.enqueue_dma source(%arg13 : memref<16x16xf32, #tpu.memory_space<vmem>>) target(%83 : memref<16x16xf32, #tpu.memory_space<any>>) target_semaphore(%85 : memref<!tpu.dma_semaphore, #tpu.memory_space<semaphore_mem>>)
      %c1_i32_39 = arith.constant 1 : i32
      %86 = tpu.memref_slice %arg11[%7, %5] : memref<16x16xf32, #tpu.memory_space<any>> -> memref<16x16xf32, #tpu.memory_space<any>>
      %87 = tpu.memref_slice %arg14[%c1_i32_39] : memref<2x!tpu.dma_semaphore, #tpu.memory_space<semaphore_mem>> -> memref<1x!tpu.dma_semaphore, #tpu.memory_space<semaphore_mem>>
      %88 = tpu.memref_squeeze %87 : memref<1x!tpu.dma_semaphore, #tpu.memory_space<semaphore_mem>> -> memref<!tpu.dma_semaphore, #tpu.memory_space<semaphore_mem>>
      tpu.wait_dma2 semaphore(%88 : memref<!tpu.dma_semaphore, #tpu.memory_space<semaphore_mem>>) src(%arg13 : memref<16x16xf32, #tpu.memory_space<vmem>>) dst(%86 : memref<16x16xf32, #tpu.memory_space<any>>)
    } else {
    }
    %c0_i32_36 = arith.constant 0 : i32
    %77 = tpu.memref_slice %arg11[%5, %7] : memref<16x16xf32, #tpu.memory_space<any>> -> memref<16x16xf32, #tpu.memory_space<any>>
    %78 = tpu.memref_slice %arg14[%c0_i32_36] : memref<2x!tpu.dma_semaphore, #tpu.memory_space<semaphore_mem>> -> memref<1x!tpu.dma_semaphore, #tpu.memory_space<semaphore_mem>>
    %79 = tpu.memref_squeeze %78 : memref<1x!tpu.dma_semaphore, #tpu.memory_space<semaphore_mem>> -> memref<!tpu.dma_semaphore, #tpu.memory_space<semaphore_mem>>
    tpu.wait_dma2 semaphore(%79 : memref<!tpu.dma_semaphore, #tpu.memory_space<semaphore_mem>>) src(%arg12 : memref<16x16xf32, #tpu.memory_space<vmem>>) dst(%77 : memref<16x16xf32, #tpu.memory_space<any>>)
    return
  }
  func.func @transform_0(%arg0: i32, %arg1: memref<1xi32, #tpu.memory_space<smem>>, %arg2: memref<1xi32, #tpu.memory_space<smem>>) -> (i32, i32) {
    %0 = arith.index_cast %arg0 : i32 to index
    %1 = memref.load %arg1[%0] : memref<1xi32, #tpu.memory_space<smem>>
    %2 = arith.index_cast %arg0 : i32 to index
    %3 = memref.load %arg2[%2] : memref<1xi32, #tpu.memory_space<smem>>
    %c0_i32 = arith.constant 0 : i32
    return %1, %3 : i32, i32
  }
  func.func @transform_1(%arg0: i32, %arg1: memref<1xi32, #tpu.memory_space<smem>>, %arg2: memref<1xi32, #tpu.memory_space<smem>>) -> (i32, i32) {
    %0 = arith.index_cast %arg0 : i32 to index
    %1 = memref.load %arg2[%0] : memref<1xi32, #tpu.memory_space<smem>>
    %2 = arith.index_cast %arg0 : i32 to index
    %3 = memref.load %arg1[%2] : memref<1xi32, #tpu.memory_space<smem>>
    %c0_i32 = arith.constant 0 : i32
    return %1, %3 : i32, i32
  }
  func.func @transform_2(%arg0: i32, %arg1: memref<1xi32, #tpu.memory_space<smem>>, %arg2: memref<1xi32, #tpu.memory_space<smem>>) -> (i32, i32) {
    %0 = arith.index_cast %arg0 : i32 to index
    %1 = memref.load %arg2[%0] : memref<1xi32, #tpu.memory_space<smem>>
    %c0_i32 = arith.constant 0 : i32
    %c0_i32_0 = arith.constant 0 : i32
    return %c0_i32, %1 : i32, i32
  }
  func.func @transform_3(%arg0: i32, %arg1: memref<1xi32, #tpu.memory_space<smem>>, %arg2: memref<1xi32, #tpu.memory_space<smem>>) -> (i32, i32) {
    %0 = arith.index_cast %arg0 : i32 to index
    %1 = memref.load %arg1[%0] : memref<1xi32, #tpu.memory_space<smem>>
    %c0_i32 = arith.constant 0 : i32
    %c0_i32_0 = arith.constant 0 : i32
    return %c0_i32, %1 : i32, i32
  }
  func.func @transform_4(%arg0: i32, %arg1: memref<1xi32, #tpu.memory_space<smem>>, %arg2: memref<1xi32, #tpu.memory_space<smem>>) -> (i32, i32) {
    %0 = arith.index_cast %arg0 : i32 to index
    %1 = memref.load %arg1[%0] : memref<1xi32, #tpu.memory_space<smem>>
    %c0_i32 = arith.constant 0 : i32
    %c0_i32_0 = arith.constant 0 : i32
    return %1, %c0_i32 : i32, i32
  }
  func.func @transform_5(%arg0: i32, %arg1: memref<1xi32, #tpu.memory_space<smem>>, %arg2: memref<1xi32, #tpu.memory_space<smem>>) -> (i32, i32) {
    %0 = arith.index_cast %arg0 : i32 to index
    %1 = memref.load %arg2[%0] : memref<1xi32, #tpu.memory_space<smem>>
    %c0_i32 = arith.constant 0 : i32
    %c0_i32_0 = arith.constant 0 : i32
    return %1, %c0_i32 : i32, i32
  }
  func.func @transform_6(%arg0: i32, %arg1: memref<1xi32, #tpu.memory_space<smem>>, %arg2: memref<1xi32, #tpu.memory_space<smem>>) -> (i32, i32) {
    %0 = arith.index_cast %arg0 : i32 to index
    %1 = memref.load %arg2[%0] : memref<1xi32, #tpu.memory_space<smem>>
    %c0_i32 = arith.constant 0 : i32
    %c0_i32_0 = arith.constant 0 : i32
    return %c0_i32, %1 : i32, i32
  }
  func.func @transform_7(%arg0: i32, %arg1: memref<1xi32, #tpu.memory_space<smem>>, %arg2: memref<1xi32, #tpu.memory_space<smem>>) -> (i32, i32) {
    %0 = arith.index_cast %arg0 : i32 to index
    %1 = memref.load %arg1[%0] : memref<1xi32, #tpu.memory_space<smem>>
    %c0_i32 = arith.constant 0 : i32
    %c0_i32_0 = arith.constant 0 : i32
    return %c0_i32, %1 : i32, i32
  }
}

</mosaic_0001>

<llo_original>
// kernel: tpu_custom_call.1
$region0: #{tpu_custom_call.1}
  #allocation0 [shape = 'u32[]', space=smem, size = 0x4, offset = 0x4, fixed_abs, tag = 'smem constant byte address 0x4 - core index']
  #allocation1 [shape = 'u32[144,128]{1,0:T(1,128)}', space=vmem, size = 0x12000, scoped, tag = 'internal scratch']
  #allocation2 [shape = 'f32[16,16]{1,0:T(8,128)}', space=vmem, size = 0x2000, scoped, tag = 'scratch operand']
  #allocation3 [shape = 'f32[16,16]{1,0:T(8,128)}', space=vmem, size = 0x2000, scoped, tag = 'scratch operand']
  #allocation4 [shape = 's32[2]{0}', space=sflag, size = 0x8, scoped, tag = 'scratch operand']
  #allocation5 [shape = 's32[1]{0}', space=sflag, size = 0x4, scoped, tag = 'scoped memory for tpu_custom_call.1']
  #allocation6 [shape = 's32[1]{0:T(128)S(6)}', space=smem, size = 0x200, scoped, tag = 'prefetched SMEM operand 0']
  #allocation7 [shape = 's32[1]{0:T(128)S(6)}', space=smem, size = 0x200, scoped, tag = 'prefetched SMEM operand 1']
  #allocation8 [shape = 's32[]', space=sflag, size = 0x4, offset = 0, fixed_abs, tag = 'sflag constant byte address 0x0 - dummy sync flag']
  #allocation9 [shape = 's32[]', space=sflag, size = 0x4, offset = 0, fixed_abs, tag = 'sflag constant byte address 0x0 - dummy sync flag']
  #allocation10 [shape = 'u32[]', space=smem, size = 0x4, offset = 0x44, fixed_abs, tag = 'smem constant byte address 0x44 - assertion arg 0']
  #allocation11 [shape = 'u32[]', space=smem, size = 0x4, offset = 0x48, fixed_abs, tag = 'smem constant byte address 0x48 - assertion arg 1']
  #allocation12 [shape = 's32[]', space=sflag, size = 0x4, offset = 0, fixed_abs, tag = 'sflag constant byte address 0x0 - dummy sync flag']
  #allocation13 [shape = 's32[]', space=sflag, size = 0x4, offset = 0, fixed_abs, tag = 'sflag constant byte address 0x0 - dummy sync flag']
  %s0 = inlined_call_operand.<no memory space> [shape: s32[1], index: 0, kind: input, shape index: {}]
  %s1 = inlined_call_operand.<no memory space> [shape: s32[1], index: 1, kind: input, shape index: {}]
  %s2 = inlined_call_operand.vmem [shape: f32[16,16], index: 2, kind: input, shape index: {}]
  %s3 = inlined_call_operand.vmem [shape: f32[16,16], index: 3, kind: input, shape index: {}]
  %s4 = inlined_call_operand.vmem [shape: f32[1,16], index: 4, kind: input, shape index: {}]
  %s5 = inlined_call_operand.vmem [shape: f32[1,16], index: 5, kind: input, shape index: {}]
  %s6 = inlined_call_operand.vmem [shape: f32[16,1], index: 6, kind: input, shape index: {}]
  %s7 = inlined_call_operand.vmem [shape: f32[16,1], index: 7, kind: input, shape index: {}]
  %s8 = inlined_call_operand.vmem [shape: f32[1,16], index: 8, kind: input, shape index: {}]
  %s9 = inlined_call_operand.vmem [shape: f32[1,16], index: 9, kind: input, shape index: {}]
  %s10 = inlined_call_operand.hbm [shape: f32[16,16], index: 10, kind: output, shape index: {}]
  %s11 = sld [smem:[#allocation0]]
  $region46: #{tpu_custom_call.1} parent=0
    _
  %s13 = ssub.s32 1, %s11
  %s14 = scalar_select 0, %s13, %s11
  %15 = sst [smem:[#allocation6]] %s0
  %16 = sst [smem:[#allocation7]] %s1
  // Predicated region
  $region2: #{tpu_custom_call.1} parent=0 // pred_check
    _
  $region3: #{tpu_custom_call.1} parent=0 // pred_check_branch
    %18 = sbr.rel (0) target = $region5
  $region4: #{tpu_custom_call.1} parent=0 // pred_region
    %s19 = sld [smem:[#allocation6]]
    %s20 = sld [smem:[#allocation7]]
    %s21 = smul.u32 2, %s19
    %p22 = scmp.lt.s32.totalorder %s21, 1
    %s23 = scalar_select %p22, %s21, 1
    %p24 = scmp.lt.s32.totalorder %s20, 0
    %s25 = scalar_select %p24, %s20, 0
    %s26 = sadd.s32 %s25, %s23
    %s27 = smul.addr %s26, 8
    %s28 = scalar_lea.vmem %s2, %s27
    %s29 = sld [smem:[#allocation6]]
    %s30 = sld [smem:[#allocation7]]
    %s31 = smul.u32 2, %s29
  $region5: #{tpu_custom_call.1} parent=0 // pred_fallthru
    _
  // Predicated region
  $region6: #{tpu_custom_call.1} parent=0 // pred_check
    _
  $region7: #{tpu_custom_call.1} parent=0 // pred_check_branch
    %33 = sbr.rel (0) target = $region9
  $region8: #{tpu_custom_call.1} parent=0 // pred_region
    %s34 = sld [smem:[#allocation7]]
    %s35 = sld [smem:[#allocation6]]
    %s36 = smul.u32 2, %s34
    %p37 = scmp.lt.s32.totalorder %s36, 1
    %s38 = scalar_select %p37, %s36, 1
    %p39 = scmp.lt.s32.totalorder %s35, 0
    %s40 = scalar_select %p39, %s35, 0
    %s41 = sadd.s32 %s40, %s38
    %s42 = smul.addr %s41, 8
    %s43 = scalar_lea.vmem %s3, %s42
    %s44 = sld [smem:[#allocation7]]
    %s45 = sld [smem:[#allocation6]]
    %s46 = smul.u32 2, %s44
  $region9: #{tpu_custom_call.1} parent=0 // pred_fallthru
    _
  // Predicated region
  $region10: #{tpu_custom_call.1} parent=0 // pred_check
    _
  $region11: #{tpu_custom_call.1} parent=0 // pred_check_branch
    %48 = sbr.rel (0) target = $region13
  $region12: #{tpu_custom_call.1} parent=0 // pred_region
    %s49 = sld [smem:[#allocation7]]
    %p50 = scmp.lt.s32.totalorder %s49, 0
    %s51 = scalar_select %p50, %s49, 0
    %s52 = scalar_lea.vmem %s4, %s51
    %s53 = sld [smem:[#allocation7]]
  $region13: #{tpu_custom_call.1} parent=0 // pred_fallthru
    _
  // Predicated region
  $region14: #{tpu_custom_call.1} parent=0 // pred_check
    _
  $region15: #{tpu_custom_call.1} parent=0 // pred_check_branch
    %55 = sbr.rel (0) target = $region17
  $region16: #{tpu_custom_call.1} parent=0 // pred_region
    %s56 = sld [smem:[#allocation6]]
    %p57 = scmp.lt.s32.totalorder %s56, 0
    %s58 = scalar_select %p57, %s56, 0
    %s59 = scalar_lea.vmem %s5, %s58
    %s60 = sld [smem:[#allocation6]]
  $region17: #{tpu_custom_call.1} parent=0 // pred_fallthru
    _
  // Predicated region
  $region18: #{tpu_custom_call.1} parent=0 // pred_check
    _
  $region19: #{tpu_custom_call.1} parent=0 // pred_check_branch
    %62 = sbr.rel (0) target = $region21
  $region20: #{tpu_custom_call.1} parent=0 // pred_region
    %s63 = sld [smem:[#allocation6]]
    %s64 = smul.u32 2, %s63
    %p65 = scmp.lt.s32.totalorder %s64, 1
    %s66 = scalar_select %p65, %s64, 1
    %s67 = smul.addr %s66, 8
    %s68 = scalar_lea.vmem %s6, %s67
    %s69 = sld [smem:[#allocation6]]
    %s70 = smul.u32 2, %s69
  $region21: #{tpu_custom_call.1} parent=0 // pred_fallthru
    _
  // Predicated region
  $region22: #{tpu_custom_call.1} parent=0 // pred_check
    _
  $region23: #{tpu_custom_call.1} parent=0 // pred_check_branch
    %72 = sbr.rel (0) target = $region25
  $region24: #{tpu_custom_call.1} parent=0 // pred_region
    %s73 = sld [smem:[#allocation7]]
    %s74 = smul.u32 2, %s73
    %p75 = scmp.lt.s32.totalorder %s74, 1
    %s76 = scalar_select %p75, %s74, 1
    %s77 = smul.addr %s76, 8
    %s78 = scalar_lea.vmem %s7, %s77
    %s79 = sld [smem:[#allocation7]]
    %s80 = smul.u32 2, %s79
  $region25: #{tpu_custom_call.1} parent=0 // pred_fallthru
    _
  // Predicated region
  $region26: #{tpu_custom_call.1} parent=0 // pred_check
    _
  $region27: #{tpu_custom_call.1} parent=0 // pred_check_branch
    %82 = sbr.rel (0) target = $region29
  $region28: #{tpu_custom_call.1} parent=0 // pred_region
    %s83 = sld [smem:[#allocation7]]
    %p84 = scmp.lt.s32.totalorder %s83, 0
    %s85 = scalar_select %p84, %s83, 0
    %s86 = scalar_lea.vmem %s8, %s85
    %s87 = sld [smem:[#allocation7]]
  $region29: #{tpu_custom_call.1} parent=0 // pred_fallthru
    _
  // Predicated region
  $region30: #{tpu_custom_call.1} parent=0 // pred_check
    _
  $region31: #{tpu_custom_call.1} parent=0 // pred_check_branch
    %89 = sbr.rel (0) target = $region33
  $region32: #{tpu_custom_call.1} parent=0 // pred_region
    %s90 = sld [smem:[#allocation6]]
    %p91 = scmp.lt.s32.totalorder %s90, 0
    %s92 = scalar_select %p91, %s90, 0
    %s93 = scalar_lea.vmem %s9, %s92
    %s94 = sld [smem:[#allocation6]]
  $region33: #{tpu_custom_call.1} parent=0 // pred_fallthru
    _
  %s95 = sld [smem:[#allocation6]]
  %s96 = sld [smem:[#allocation7]]
  %s97 = smul.u32 2, %s95
  %p98 = scmp.lt.s32.totalorder %s97, 1
  %s99 = scalar_select %p98, %s97, 1
  %p100 = scmp.lt.s32.totalorder %s96, 0
  %s101 = scalar_select %p100, %s96, 0
  %s102 = sadd.s32 %s101, %s99
  %s103 = smul.addr %s102, 8
  %s104 = scalar_lea.vmem %s2, %s103
  %s105 = sld [smem:[#allocation7]]
  %s106 = sld [smem:[#allocation6]]
  %s107 = smul.u32 2, %s105
  %p108 = scmp.lt.s32.totalorder %s107, 1
  %s109 = scalar_select %p108, %s107, 1
  %p110 = scmp.lt.s32.totalorder %s106, 0
  %s111 = scalar_select %p110, %s106, 0
  %s112 = sadd.s32 %s111, %s109
  %s113 = smul.addr %s112, 8
  %s114 = scalar_lea.vmem %s3, %s113
  %s115 = sld [smem:[#allocation7]]
  %p116 = scmp.lt.s32.totalorder %s115, 0
  %s117 = scalar_select %p116, %s115, 0
  %s118 = scalar_lea.vmem %s4, %s117
  %s119 = sld [smem:[#allocation6]]
  %p120 = scmp.lt.s32.totalorder %s119, 0
  %s121 = scalar_select %p120, %s119, 0
  %s122 = scalar_lea.vmem %s5, %s121
  %s123 = sld [smem:[#allocation6]]
  %s124 = smul.u32 2, %s123
  %p125 = scmp.lt.s32.totalorder %s124, 1
  %s126 = scalar_select %p125, %s124, 1
  %s127 = smul.addr %s126, 8
  %s128 = scalar_lea.vmem %s6, %s127
  %s129 = sld [smem:[#allocation7]]
  %s130 = smul.u32 2, %s129
  %p131 = scmp.lt.s32.totalorder %s130, 1
  %s132 = scalar_select %p131, %s130, 1
  %s133 = smul.addr %s132, 8
  %s134 = scalar_lea.vmem %s7, %s133
  %s135 = sld [smem:[#allocation7]]
  %p136 = scmp.lt.s32.totalorder %s135, 0
  %s137 = scalar_select %p136, %s135, 0
  %s138 = scalar_lea.vmem %s8, %s137
  %s139 = sld [smem:[#allocation6]]
  %p140 = scmp.lt.s32.totalorder %s139, 0
  %s141 = scalar_select %p140, %s139, 0
  %s142 = scalar_lea.vmem %s9, %s141
  %s143 = sld [smem:[#allocation6]]
  %s144 = sld [smem:[#allocation7]]
  %s145 = smul.u32 2, %s143
  %p146 = scmp.lt.s32.totalorder %s145, 1
  %s147 = scalar_select %p146, %s145, 1
  %p148 = scmp.lt.s32.totalorder %s144, 0
  %s149 = scalar_select %p148, %s144, 0
  %s150 = sadd.s32 %s149, %s147
  %s151 = smul.addr %s150, 8
  %s152 = scalar_lea.vmem %s2, %s151
  %s153 = sld [smem:[#allocation6]]
  %s154 = sld [smem:[#allocation7]]
  %s155 = smul.u32 2, %s153
  %s156 = sld [smem:[#allocation7]]
  %s157 = sld [smem:[#allocation6]]
  %s158 = smul.u32 2, %s156
  %p159 = scmp.lt.s32.totalorder %s158, 1
  %s160 = scalar_select %p159, %s158, 1
  %p161 = scmp.lt.s32.totalorder %s157, 0
  %s162 = scalar_select %p161, %s157, 0
  %s163 = sadd.s32 %s162, %s160
  %s164 = smul.addr %s163, 8
  %s165 = scalar_lea.vmem %s3, %s164
  %s166 = sld [smem:[#allocation7]]
  %s167 = sld [smem:[#allocation6]]
  %s168 = smul.u32 2, %s166
  %s169 = sld [smem:[#allocation7]]
  %p170 = scmp.lt.s32.totalorder %s169, 0
  %s171 = scalar_select %p170, %s169, 0
  %s172 = scalar_lea.vmem %s4, %s171
  %s173 = sld [smem:[#allocation7]]
  %s174 = sld [smem:[#allocation6]]
  %p175 = scmp.lt.s32.totalorder %s174, 0
  %s176 = scalar_select %p175, %s174, 0
  %s177 = scalar_lea.vmem %s5, %s176
  %s178 = sld [smem:[#allocation6]]
  %s179 = sld [smem:[#allocation6]]
  %s180 = smul.u32 2, %s179
  %p181 = scmp.lt.s32.totalorder %s180, 1
  %s182 = scalar_select %p181, %s180, 1
  %s183 = smul.addr %s182, 8
  %s184 = scalar_lea.vmem %s6, %s183
  %s185 = sld [smem:[#allocation6]]
  %s186 = smul.u32 2, %s185
  %s187 = sld [smem:[#allocation7]]
  %s188 = smul.u32 2, %s187
  %p189 = scmp.lt.s32.totalorder %s188, 1
  %s190 = scalar_select %p189, %s188, 1
  %s191 = smul.addr %s190, 8
  %s192 = scalar_lea.vmem %s7, %s191
  %s193 = sld [smem:[#allocation7]]
  %s194 = smul.u32 2, %s193
  %s195 = sld [smem:[#allocation7]]
  %p196 = scmp.lt.s32.totalorder %s195, 0
  %s197 = scalar_select %p196, %s195, 0
  %s198 = scalar_lea.vmem %s8, %s197
  %s199 = sld [smem:[#allocation7]]
  %s200 = sld [smem:[#allocation6]]
  %p201 = scmp.lt.s32.totalorder %s200, 0
  %s202 = scalar_select %p201, %s200, 0
  %s203 = scalar_lea.vmem %s9, %s202
  %s204 = sld [smem:[#allocation6]]
  %s205 = sld [smem:[#allocation6]]
  %s206 = sld [smem:[#allocation7]]
  %s207 = smul.u32 %s205, 16
  %s208 = smul.u32 %s206, 16
  %v209 = vld [vmem:[%s152] sm:$0xff]
  %v210 = vld [vmem:[%s152 + $0x8] sm:$0xff]
  %v211 = vld [vmem:[%s172] sm:$0x1]
  %v212 = vld [vmem:[%s184] sm:$0xff]
  %v213 = vld [vmem:[%s184 + $0x8] sm:$0xff]
  %v214 = vld [vmem:[%s198] sm:$0x1]
  %v216 = vlaneseq
  %v217 = vshrl.u32 %v216, 7
  %v218 = vsub.s32 0, %v217
  %v219 = vrot.slane %v211, %v218
  %222 = vset.pattern.permute.xlu0 0
  %223 = vperm.xlu0 %222, %v212
  %v224 = vpop.permute.xlu0 %223
  %227 = vset.pattern.permute.xlu0 0
  %228 = vperm.xlu0 %227, %v213
  %v229 = vpop.permute.xlu0 %228
  %v231 = vsub.f32 %v219, %v224
  %v232 = vsub.f32 %v219, %v229
  %v233 = vmul.f32 %v209, 0.5
  %v234 = vmul.f32 %v210, 0.5
  %v235 = vtanh.pop %v233
  %v236 = vtanh.pop %v234
  %v237 = vmul.f32 %v235, 0.5
  %v238 = vmul.f32 %v236, 0.5
  %v239 = vadd.f32 %v237, 0.5
  %v240 = vadd.f32 %v238, 0.5
  %vm241 = vcmp.gt.f32.partialorder %v231, 0.0
  %vm242 = vcmp.gt.f32.partialorder %v232, 0.0
  %v243 = vmul.f32 %v231, 0.5
  %v244 = vmul.f32 %v232, 0.5
  %v245 = vtanh.pop %v243
  %v246 = vtanh.pop %v244
  %v247 = vmul.f32 %v245, 0.5
  %v248 = vmul.f32 %v246, 0.5
  %v249 = vadd.f32 %v247, 0.5
  %v250 = vadd.f32 %v248, 0.5
  %v251 = vmul.f32 %v249, 1.1
  %v252 = vmul.f32 %v250, 1.1
  %v253 = vsel %vm241, %v251, -0.1
  %v254 = vsel %vm242, %v252, -0.1
  %v256 = vlaneseq
  %v257 = vshrl.u32 %v256, 7
  %v258 = vsub.s32 0, %v257
  %v259 = vrot.slane %v214, %v258
  %v261 = vsub.f32 %v253, %v259
  %v262 = vsub.f32 %v254, %v259
  %v263 = vmul.f32 %v239, %v261
  %v264 = vmul.f32 %v240, %v262
  %v265 = vld [vmem:[%s165] sm:$0xff]
  %v266 = vld [vmem:[%s165 + $0x8] sm:$0xff]
  %v267 = vld [vmem:[%s177] sm:$0x1]
  %v268 = vld [vmem:[%s192] sm:$0xff]
  %v269 = vld [vmem:[%s192 + $0x8] sm:$0xff]
  %v270 = vld [vmem:[%s203] sm:$0x1]
  %v272 = vlaneseq
  %v273 = vshrl.u32 %v272, 7
  %v274 = vsub.s32 0, %v273
  %v275 = vrot.slane %v267, %v274
  %278 = vset.pattern.permute.xlu0 0
  %279 = vperm.xlu0 %278, %v268
  %v280 = vpop.permute.xlu0 %279
  %283 = vset.pattern.permute.xlu0 0
  %284 = vperm.xlu0 %283, %v269
  %v285 = vpop.permute.xlu0 %284
  %v287 = vsub.f32 %v275, %v280
  %v288 = vsub.f32 %v275, %v285
  %v289 = vmul.f32 %v265, 0.5
  %v290 = vmul.f32 %v266, 0.5
  %v291 = vtanh.pop %v289
  %v292 = vtanh.pop %v290
  %v293 = vmul.f32 %v291, 0.5
  %v294 = vmul.f32 %v292, 0.5
  %v295 = vadd.f32 %v293, 0.5
  %v296 = vadd.f32 %v294, 0.5
  %vm297 = vcmp.gt.f32.partialorder %v287, 0.0
  %vm298 = vcmp.gt.f32.partialorder %v288, 0.0
  %v299 = vmul.f32 %v287, 0.5
  %v300 = vmul.f32 %v288, 0.5
  %v301 = vtanh.pop %v299
  %v302 = vtanh.pop %v300
  %v303 = vmul.f32 %v301, 0.5
  %v304 = vmul.f32 %v302, 0.5
  %v305 = vadd.f32 %v303, 0.5
  %v306 = vadd.f32 %v304, 0.5
  %v307 = vmul.f32 %v305, 1.1
  %v308 = vmul.f32 %v306, 1.1
  %v309 = vsel %vm297, %v307, -0.1
  %v310 = vsel %vm298, %v308, -0.1
  %v312 = vlaneseq
  %v313 = vshrl.u32 %v312, 7
  %v314 = vsub.s32 0, %v313
  %v315 = vrot.slane %v270, %v314
  %v317 = vsub.f32 %v309, %v315
  %v318 = vsub.f32 %v310, %v315
  %v319 = vmul.f32 %v295, %v317
  %v320 = vmul.f32 %v296, %v318
  %321 = vxpose.xlu0.b32.start [1/16] %v319, 128
  %322 = vxpose.xlu0.b32.cont [2/16] %v320, 128
  %323 = vxpose.xlu0.b32.cont [3/16] 0.0, 128
  %324 = vxpose.xlu0.b32.cont [4/16] 0.0, 128
  %325 = vxpose.xlu0.b32.cont [5/16] 0.0, 128
  %326 = vxpose.xlu0.b32.cont [6/16] 0.0, 128
  %327 = vxpose.xlu0.b32.cont [7/16] 0.0, 128
  %328 = vxpose.xlu0.b32.cont [8/16] 0.0, 128
  %329 = vxpose.xlu0.b32.cont [9/16] 0.0, 128
  %330 = vxpose.xlu0.b32.cont [10/16] 0.0, 128
  %331 = vxpose.xlu0.b32.cont [11/16] 0.0, 128
  %332 = vxpose.xlu0.b32.cont [12/16] 0.0, 128
  %333 = vxpose.xlu0.b32.cont [13/16] 0.0, 128
  %334 = vxpose.xlu0.b32.cont [14/16] 0.0, 128
  %335 = vxpose.xlu0.b32.cont [15/16] 0.0, 128
  %336 = vxpose.xlu0.b32.end [16/16] 0.0, 128
  %v337 = vpop.trf.xlu0
  %v338 = vpop.trf.xlu0
  %v339 = vpop.trf.xlu0
  %v340 = vpop.trf.xlu0
  %v341 = vpop.trf.xlu0
  %v342 = vpop.trf.xlu0
  %v343 = vpop.trf.xlu0
  %v344 = vpop.trf.xlu0
  %v345 = vpop.trf.xlu0
  %v346 = vpop.trf.xlu0
  %v347 = vpop.trf.xlu0
  %v348 = vpop.trf.xlu0
  %v349 = vpop.trf.xlu0
  %v350 = vpop.trf.xlu0
  %v351 = vpop.trf.xlu0
  %v352 = vpop.trf.xlu0
  %v353 = vadd.f32 %v263, %v337
  %v354 = vadd.f32 %v264, %v338
  %vm355 = vcmask 130048
  %356 = vst.msk [vmem:[#allocation2] sm:$0xff] %vm355, %v353
  %357 = vst.msk [vmem:[#allocation2 + $0x8] sm:$0xff] %vm355, %v354
  %s358 = sshra.s32 %s208, 7
  %s359 = sand.u32 %s208, 127
  %s360 = sadd.s32 %s358, %s207
  %s361 = smul.addr %s360, 16
  %s362 = scalar_lea.hbm %s10, %s361
  // Predicated region
  $region34: #{tpu_custom_call.1} parent=0 // pred_check
    _
  $region35: #{tpu_custom_call.1} parent=0 // pred_check_branch
    %364 = sbr.rel target = $region37
  $region36: #{tpu_custom_call.1} parent=0 // pred_region
    %365 = sst [smem:[#allocation10]] [#allocation9]
    %366 = sst [smem:[#allocation11]] [#allocation8]
  $region37: #{tpu_custom_call.1} parent=0 // pred_fallthru
    _
  %368 = shalt.err (0)
  %s370 = sshll.u32 [#allocation2], 4
  %s371 = int_to_ptr.vmem [resolvable:$true] %s370
  %373 = dma.vmem_to_hbm [thread:$0]  %s371, 256, %s362, [#allocation4]
  %p374 = scmp.ne.s32.totalorder %s205, %s206
  // Predicated region
  $region38: #{tpu_custom_call.1} parent=0 // pred_check
    %p375 = pneg %p374
  $region39: #{tpu_custom_call.1} parent=0 // pred_check_branch
    %377 = sbr.rel (%p375) target = $region41
  $region40: #{tpu_custom_call.1} parent=0 // pred_region
    %378 = vxpose.xlu0.b32.start [1/16] %v263, 128
    %379 = vxpose.xlu0.b32.cont [2/16] %v264, 128
    %380 = vxpose.xlu0.b32.cont [3/16] 0.0, 128
    %381 = vxpose.xlu0.b32.cont [4/16] 0.0, 128
    %382 = vxpose.xlu0.b32.cont [5/16] 0.0, 128
    %383 = vxpose.xlu0.b32.cont [6/16] 0.0, 128
    %384 = vxpose.xlu0.b32.cont [7/16] 0.0, 128
    %385 = vxpose.xlu0.b32.cont [8/16] 0.0, 128
    %386 = vxpose.xlu0.b32.cont [9/16] 0.0, 128
    %387 = vxpose.xlu0.b32.cont [10/16] 0.0, 128
    %388 = vxpose.xlu0.b32.cont [11/16] 0.0, 128
    %389 = vxpose.xlu0.b32.cont [12/16] 0.0, 128
    %390 = vxpose.xlu0.b32.cont [13/16] 0.0, 128
    %391 = vxpose.xlu0.b32.cont [14/16] 0.0, 128
    %392 = vxpose.xlu0.b32.cont [15/16] 0.0, 128
    %393 = vxpose.xlu0.b32.end [16/16] 0.0, 128
    %v394 = vpop.trf.xlu0
    %v395 = vpop.trf.xlu0
    %v396 = vpop.trf.xlu0
    %v397 = vpop.trf.xlu0
    %v398 = vpop.trf.xlu0
    %v399 = vpop.trf.xlu0
    %v400 = vpop.trf.xlu0
    %v401 = vpop.trf.xlu0
    %v402 = vpop.trf.xlu0
    %v403 = vpop.trf.xlu0
    %v404 = vpop.trf.xlu0
    %v405 = vpop.trf.xlu0
    %v406 = vpop.trf.xlu0
    %v407 = vpop.trf.xlu0
    %v408 = vpop.trf.xlu0
    %v409 = vpop.trf.xlu0
    %v410 = vadd.f32 %v319, %v394
    %v411 = vadd.f32 %v320, %v395
    %412 = vst.msk [vmem:[#allocation3] sm:$0xff] %vm355, %v410
    %413 = vst.msk [vmem:[#allocation3 + $0x8] sm:$0xff] %vm355, %v411
    %s414 = sshra.s32 %s207, 7
    %s415 = sand.u32 %s207, 127
    %s416 = sadd.s32 %s414, %s208
    %s417 = smul.addr %s416, 16
    %s418 = scalar_lea.hbm %s10, %s417
    %s419 = scalar_lea.sflag [#allocation4], 1
    // Predicated region
    $region42: #{tpu_custom_call.1} parent=40 // pred_check
      _
    $region43: #{tpu_custom_call.1} parent=40 // pred_check_branch
      %421 = sbr.rel target = $region45
    $region44: #{tpu_custom_call.1} parent=40 // pred_region
      %422 = sst [smem:[#allocation10]] [#allocation13]
      %423 = sst [smem:[#allocation11]] [#allocation12]
    $region45: #{tpu_custom_call.1} parent=40 // pred_fallthru
      _
    %425 = shalt.err (0)
    %s427 = sshll.u32 [#allocation3], 4
    %s428 = int_to_ptr.vmem [resolvable:$true] %s427
    %430 = dma.vmem_to_hbm [thread:$0]  %s428, 256, %s418, %s419
    %s431 = smul.u32 16, 1
    %s432 = sshll.u32 %s431, 4
    %433 = dma.done %s419, %s432
  $region41: #{tpu_custom_call.1} parent=0 // pred_fallthru
    _
  %s434 = smul.u32 16, 1
  %s435 = sshll.u32 %s434, 4
  %436 = dma.done [#allocation4], %s435
  %437 = vsyncmov [#allocation4]
  %s438 = vpop.sfrf %437
  %p439 = scmp.eq.s32.totalorder %s438, 0
  %p440 = pneg %p439
  %442 = shalt.err (%p440)
  %s443 = scalar_lea.sflag [#allocation4], 1
  %444 = vsyncmov %s443
  %s445 = vpop.sfrf %444
  %p446 = scmp.eq.s32.totalorder %s445, 0
  %p447 = pneg %p446
  %449 = shalt.err (%p447)

</llo_original>
